<compile_context>
chip_gen: v7x
topology: tpu7x:2x2x1
jax: 0.10.0
libtpu: 0.0.40
codegen_flags: <defaults>
</compile_context>

<pallas_src>
import functools

import jax
import jax.numpy as jnp
from jax.experimental import pallas as pl
from jax.experimental.pallas import tpu as pltpu

_LANE = 128


def _round_up(x, m):
    return (x + m - 1) // m * m


def _policy_kernel(obs_ref, w1_ref, b1_ref, w2_ref, b2_ref, w3_ref, b3_ref,
                   scale_ref, offset_ref, out_ref):
    x = obs_ref[...]

    # Layer 1: Linear + ReLU
    h = jnp.dot(x, w1_ref[...], preferred_element_type=jnp.float32) + b1_ref[...]
    h = jnp.maximum(h, 0.0)

    # Layer 2: Linear + ReLU
    h = jnp.dot(h, w2_ref[...], preferred_element_type=jnp.float32) + b2_ref[...]
    h = jnp.maximum(h, 0.0)

    # Output layer: Linear (identity output activation), lane-dense (padded).
    a = jnp.dot(h, w3_ref[...], preferred_element_type=jnp.float32) + b3_ref[...]

    # Squash into action limits: scale * tanh(a) + offset (precomputed on host).
    out_ref[...] = scale_ref[...] * jnp.tanh(a) + offset_ref[...]


def _run_policy_mlp(obs, w1, b1, w2, b2, w3, b3, scale, offset, *, batch_tile):
    """Run the 3-layer policy MLP + tanh squash. Returns (B, out_dim) f32."""
    B, obs_dim = obs.shape
    h1 = w1.shape[1]
    h2 = w2.shape[1]
    out_dim = w3.shape[1]
    out_pad = _round_up(out_dim, _LANE)
    pad = out_pad - out_dim

    # Pad the last layer so the output is lane-dense (full 128-wide stores).
    w3p = jnp.pad(w3, ((0, 0), (0, pad)))
    b3p = jnp.pad(b3, (0, pad)).reshape(1, out_pad)
    scale_p = jnp.pad(scale, (0, pad)).reshape(1, out_pad)
    offset_p = jnp.pad(offset, (0, pad)).reshape(1, out_pad)
    b1r = b1.reshape(1, h1)
    b2r = b2.reshape(1, h2)

    inputs = (obs, w1, b1r, w2, b2r, w3p, b3p, scale_p, offset_p)

    weight_bytes = 4 * (obs_dim * h1 + h1 + h1 * h2 + h2 + h2 * out_pad
                        + 3 * out_pad)
    cost = pl.CostEstimate(
        flops=2 * B * (obs_dim * h1 + h1 * h2 + h2 * out_pad) + 6 * B * out_pad,
        transcendentals=B * out_pad,
        bytes_accessed=weight_bytes + 4 * B * (obs_dim + out_pad),
    )

    out_shape = jax.ShapeDtypeStruct((B, out_pad), jnp.float32)

    if B <= batch_tile:
        # Tiny-batch path: everything trivially fits in VMEM -> no grid, no
        # pipeline machinery, whole arrays as single VMEM-resident blocks.
        flat = pl.pallas_call(
            _policy_kernel,
            out_shape=out_shape,
            cost_estimate=cost,
        )(*inputs)
    else:
        # Large-batch path: stream obs/out over the batch ("parallel" axis for
        # megacore), weights/biases/limits stay resident (constant index_map).
        tb = batch_tile
        grid = (pl.cdiv(B, tb),)
        const = lambda i: (0, 0)
        in_specs = [
            pl.BlockSpec((tb, obs_dim), lambda i: (i, 0)),
            pl.BlockSpec((obs_dim, h1), const),
            pl.BlockSpec((1, h1), const),
            pl.BlockSpec((h1, h2), const),
            pl.BlockSpec((1, h2), const),
            pl.BlockSpec((h2, out_pad), const),
            pl.BlockSpec((1, out_pad), const),
            pl.BlockSpec((1, out_pad), const),
            pl.BlockSpec((1, out_pad), const),
        ]
        out_specs = pl.BlockSpec((tb, out_pad), lambda i: (i, 0))
        flat = pl.pallas_call(
            _policy_kernel,
            out_shape=out_shape,
            grid=grid,
            in_specs=in_specs,
            out_specs=out_specs,
            cost_estimate=cost,
            compiler_params=pltpu.CompilerParams(
                dimension_semantics=("parallel",)),
        )(*inputs)

    if pad:
        flat = flat[:, :out_dim]
    return flat


@functools.partial(jax.jit,
                   static_argnames=("pre_horizon", "act_dim", "batch_tile"))
def forward_all_policy(obs, params, act_high_lim, act_low_lim, *,
                       pre_horizon, act_dim, batch_tile=512):
    """Returns actions of shape (B, pre_horizon, act_dim)."""
    w1, b1, w2, b2, w3, b3 = params
    hi = act_high_lim.astype(jnp.float32)
    lo = act_low_lim.astype(jnp.float32)
    # Precompute scale/offset once and tile across the horizon (matches the
    # act-limit broadcast over the trailing act_dim of the reshaped output).
    scale = jnp.tile((hi - lo) * 0.5, pre_horizon)
    offset = jnp.tile((hi + lo) * 0.5, pre_horizon)

    flat = _run_policy_mlp(obs.astype(jnp.float32), w1, b1, w2, b2, w3, b3,
                           scale, offset, batch_tile=batch_tile)
    return flat.reshape(obs.shape[0], pre_horizon, act_dim)


@functools.partial(jax.jit,
                   static_argnames=("pre_horizon", "act_dim", "batch_tile"))
def forward(obs, params, act_high_lim, act_low_lim, *,
            pre_horizon, act_dim, batch_tile=512):
    """Equivalent of FiniteHorizonFullPolicy.forward: first-step action only.

    The output layer is sliced to its first act_dim columns on the host so the
    kernel never computes (or stores) the other pre_horizon-1 steps.
    """
    del pre_horizon  # only the first step is produced
    w1, b1, w2, b2, w3, b3 = params
    hi = act_high_lim.astype(jnp.float32)
    lo = act_low_lim.astype(jnp.float32)
    scale = (hi - lo) * 0.5
    offset = (hi + lo) * 0.5
    return _run_policy_mlp(obs.astype(jnp.float32), w1, b1, w2, b2,
                           w3[:, :act_dim], b3[:act_dim],
                           scale, offset, batch_tile=batch_tile)


def init_params(key, obs_dim, hidden_sizes, out_dim):
    """Deterministic synthetic weights, stored as (in, out)."""
    sizes = [obs_dim] + list(hidden_sizes) + [out_dim]
    params = []
    for j in range(len(sizes) - 1):
        key, kw, kb = jax.random.split(key, 3)
        fan_in = sizes[j]
        bound = 1.0 / jnp.sqrt(fan_in)
        w = jax.random.uniform(kw, (sizes[j], sizes[j + 1]),
                               minval=-bound, maxval=bound, dtype=jnp.float32)
        b = jax.random.uniform(kb, (sizes[j + 1],),
                               minval=-bound, maxval=bound, dtype=jnp.float32)
        params += [w, b]
    return tuple(params)


def _reference(obs, params, hi, lo, pre_horizon, act_dim):
    w1, b1, w2, b2, w3, b3 = params
    h = jnp.maximum(obs @ w1 + b1, 0.0)
    h = jnp.maximum(h @ w2 + b2, 0.0)
    a = (h @ w3 + b3).reshape(obs.shape[0], pre_horizon, act_dim)
    return (hi - lo) / 2 * jnp.tanh(a) + (hi + lo) / 2


if __name__ == "__main__":
    # Small config consistent with the module's __init__.
    obs_dim = 16
    act_dim = 4
    pre_horizon = 8
    hidden_sizes = (32, 32)

    key = jax.random.PRNGKey(0)
    key, k_small, k_big = jax.random.split(key, 3)

    params = init_params(key, obs_dim, hidden_sizes, act_dim * pre_horizon)
    act_high_lim = jnp.ones((act_dim,), dtype=jnp.float32) * 2.0
    act_low_lim = -jnp.ones((act_dim,), dtype=jnp.float32)

    # --- tiny batch: un-gridded single-VMEM-block path -------------------
    obs_s = jax.random.normal(k_small, (8, obs_dim), dtype=jnp.float32)
    all_s = forward_all_policy(obs_s, params, act_high_lim, act_low_lim,
                               pre_horizon=pre_horizon, act_dim=act_dim)
    act_s = forward(obs_s, params, act_high_lim, act_low_lim,
                    pre_horizon=pre_horizon, act_dim=act_dim)
    jax.block_until_ready((all_s, act_s))

    ref_s = _reference(obs_s, params, act_high_lim, act_low_lim,
                       pre_horizon, act_dim)
    assert all_s.shape == (8, pre_horizon, act_dim)
    assert act_s.shape == (8, act_dim)
    assert jnp.allclose(all_s, ref_s, atol=1e-5, rtol=1e-5)
    assert jnp.allclose(act_s, ref_s[:, 0, :], atol=1e-5, rtol=1e-5)

    # --- larger batch with a small batch_tile: streamed grid path --------
    # (40 rows with tile 16 also exercises the ragged final block.)
    obs_b = jax.random.normal(k_big, (40, obs_dim), dtype=jnp.float32)
    all_b = forward_all_policy(obs_b, params, act_high_lim, act_low_lim,
                               pre_horizon=pre_horizon, act_dim=act_dim,
                               batch_tile=16)
    act_b = forward(obs_b, params, act_high_lim, act_low_lim,
                    pre_horizon=pre_horizon, act_dim=act_dim, batch_tile=16)
    jax.block_until_ready((all_b, act_b))

    ref_b = _reference(obs_b, params, act_high_lim, act_low_lim,
                       pre_horizon, act_dim)
    assert all_b.shape == (40, pre_horizon, act_dim)
    assert act_b.shape == (40, act_dim)
    assert jnp.allclose(all_b, ref_b, atol=1e-5, rtol=1e-5)
    assert jnp.allclose(act_b, ref_b[:, 0, :], atol=1e-5, rtol=1e-5)

    print("KERNEL_OK")
</pallas_src>

<mosaic_0001>
module attributes {stable_mosaic.version = 11 : i64} {
  func.func @_policy_kernel(%arg0: memref<8x16xf32, #tpu.memory_space<vmem>>, %arg1: memref<16x32xf32, #tpu.memory_space<vmem>>, %arg2: memref<1x32xf32, #tpu.memory_space<vmem>>, %arg3: memref<32x32xf32, #tpu.memory_space<vmem>>, %arg4: memref<1x32xf32, #tpu.memory_space<vmem>>, %arg5: memref<32x128xf32, #tpu.memory_space<vmem>>, %arg6: memref<1x128xf32, #tpu.memory_space<vmem>>, %arg7: memref<1x128xf32, #tpu.memory_space<vmem>>, %arg8: memref<1x128xf32, #tpu.memory_space<vmem>>, %arg9: memref<8x128xf32, #tpu.memory_space<vmem>>) attributes {dimension_semantics = [], scalar_prefetch = 0 : i64, scratch_operands = 0 : i64, tpu.core_type = #tpu.core_type<tc>} {
    %c0 = arith.constant 0 : index
    %c0_0 = arith.constant 0 : index
    %0 = vector.load %arg0[%c0, %c0_0] : memref<8x16xf32, #tpu.memory_space<vmem>>, vector<8x16xf32>
    %c0_1 = arith.constant 0 : index
    %c0_2 = arith.constant 0 : index
    %1 = vector.load %arg1[%c0_1, %c0_2] : memref<16x32xf32, #tpu.memory_space<vmem>>, vector<16x32xf32>
    %cst = arith.constant dense<0.000000e+00> : vector<8x32xf32>
    %2 = tpu.matmul %0, %1, %cst {dimension_numbers = #tpu.dot_dimension_numbers<[1], [0], [0], [1], [0, 0, 1, 1], [], []>} : vector<8x16xf32>, vector<16x32xf32>, vector<8x32xf32> -> vector<8x32xf32>
    %c0_3 = arith.constant 0 : index
    %c0_4 = arith.constant 0 : index
    %3 = vector.load %arg2[%c0_3, %c0_4] : memref<1x32xf32, #tpu.memory_space<vmem>>, vector<1x32xf32>
    %4 = vector.broadcast %3 : vector<1x32xf32> to vector<8x32xf32>
    %5 = arith.addf %2, %4 : vector<8x32xf32>
    %cst_5 = arith.constant 0.000000e+00 : f32
    %6 = vector.broadcast %cst_5 : f32 to vector<8x32xf32>
    %7 = arith.maximumf %5, %6 : vector<8x32xf32>
    %c0_6 = arith.constant 0 : index
    %c0_7 = arith.constant 0 : index
    %8 = vector.load %arg3[%c0_6, %c0_7] : memref<32x32xf32, #tpu.memory_space<vmem>>, vector<32x32xf32>
    %cst_8 = arith.constant dense<0.000000e+00> : vector<8x32xf32>
    %9 = tpu.matmul %7, %8, %cst_8 {dimension_numbers = #tpu.dot_dimension_numbers<[1], [0], [0], [1], [0, 0, 1, 1], [], []>} : vector<8x32xf32>, vector<32x32xf32>, vector<8x32xf32> -> vector<8x32xf32>
    %c0_9 = arith.constant 0 : index
    %c0_10 = arith.constant 0 : index
    %10 = vector.load %arg4[%c0_9, %c0_10] : memref<1x32xf32, #tpu.memory_space<vmem>>, vector<1x32xf32>
    %11 = vector.broadcast %10 : vector<1x32xf32> to vector<8x32xf32>
    %12 = arith.addf %9, %11 : vector<8x32xf32>
    %cst_11 = arith.constant 0.000000e+00 : f32
    %13 = vector.broadcast %cst_11 : f32 to vector<8x32xf32>
    %14 = arith.maximumf %12, %13 : vector<8x32xf32>
    %c0_12 = arith.constant 0 : index
    %c0_13 = arith.constant 0 : index
    %15 = vector.load %arg5[%c0_12, %c0_13] : memref<32x128xf32, #tpu.memory_space<vmem>>, vector<32x128xf32>
    %cst_14 = arith.constant dense<0.000000e+00> : vector<8x128xf32>
    %16 = tpu.matmul %14, %15, %cst_14 {dimension_numbers = #tpu.dot_dimension_numbers<[1], [0], [0], [1], [0, 0, 1, 1], [], []>} : vector<8x32xf32>, vector<32x128xf32>, vector<8x128xf32> -> vector<8x128xf32>
    %c0_15 = arith.constant 0 : index
    %c0_16 = arith.constant 0 : index
    %17 = vector.load %arg6[%c0_15, %c0_16] : memref<1x128xf32, #tpu.memory_space<vmem>>, vector<1x128xf32>
    %18 = vector.broadcast %17 : vector<1x128xf32> to vector<8x128xf32>
    %19 = arith.addf %16, %18 : vector<8x128xf32>
    %c0_17 = arith.constant 0 : index
    %c0_18 = arith.constant 0 : index
    %20 = vector.load %arg7[%c0_17, %c0_18] : memref<1x128xf32, #tpu.memory_space<vmem>>, vector<1x128xf32>
    %21 = math.tanh %19 : vector<8x128xf32>
    %22 = vector.broadcast %20 : vector<1x128xf32> to vector<8x128xf32>
    %23 = arith.mulf %22, %21 : vector<8x128xf32>
    %c0_19 = arith.constant 0 : index
    %c0_20 = arith.constant 0 : index
    %24 = vector.load %arg8[%c0_19, %c0_20] : memref<1x128xf32, #tpu.memory_space<vmem>>, vector<1x128xf32>
    %25 = vector.broadcast %24 : vector<1x128xf32> to vector<8x128xf32>
    %26 = arith.addf %23, %25 : vector<8x128xf32>
    %c0_21 = arith.constant 0 : index
    %c0_22 = arith.constant 0 : index
    %27 = vector.load %arg9[%c0_21, %c0_22] : memref<8x128xf32, #tpu.memory_space<vmem>>, vector<8x128xf32>
    tpu.vector_store %arg9[%c0_21, %c0_22], %26 {strides = array<i32>} : memref<8x128xf32, #tpu.memory_space<vmem>>, vector<8x128xf32>,
    return
  }
}

</mosaic_0001>

<llo_original>
// kernel: tile.18
$region0: #{tile.18}
  #allocation0 [shape = 's32[1]{0}', space=sflag, size = 0x4, scoped, tag = 'scoped memory for tile.18']
  %s0 = inlined_call_operand.vmem [shape: f32[4], index: 0, kind: input, shape index: {}]
  %s1 = inlined_call_operand.vmem [shape: f32[8,4], index: 1, kind: output, shape index: {}]
  // Predicated region
  $region2: #{tile.18} parent=0 // pred_check
    _
  $region3: #{tile.18} parent=0 // pred_check_branch
    %3 = sbr.rel (0) target = $region5
  $region4: #{tile.18} parent=0 // pred_region
    _
  $region5: #{tile.18} parent=0 // pred_fallthru
    _
  %v4 = vld [vmem:[%s0] ss:$0 sm:$0xff]
  %5 = vst [vmem:[%s1] sm:$0xff] %v4

// kernel: tile.19
$region0: #{tile.19}
  %s0 = inlined_call_operand.vmem [shape: f32[8,4], index: 0, kind: input, shape index: {}]
  %s1 = inlined_call_operand.vmem [shape: f32[32], index: 1, kind: output, shape index: {}]
  $region1: #{tile.19} parent=0
    #allocation0 [shape = 'u8[4096]{0}', space=vmem, size = 0x1000, scoped, tag = 'scoped mem for output reshape']
    %v2 = vld [vmem:[%s0] sm:$0x1]
    %vm3 = vcmask 31744
    %4 = vst.msk [vmem:[#allocation0] sm:$0x1] %vm3, %v2
    %s5 = scalar_lea.vmem %s0, 7
    %v6 = vld [vmem:[%s5] sm:$0x1]
    %7 = vrot.lane.b32.xlu0 %v6, 28
    %v8 = vpop.permute.xlu0 %7
    %vm9 = vcmask 261344
    %10 = vst.msk [vmem:[#allocation0] sm:$0x1] %vm9, %v8
    %s11 = scalar_lea.vmem %s0, 6
    %v12 = vld [vmem:[%s11] sm:$0x1]
    %13 = vrot.lane.b32.xlu0 %v12, 24
    %v14 = vpop.permute.xlu0 %13
    %vm15 = vcmask 228544
    %16 = vst.msk [vmem:[#allocation0] sm:$0x1] %vm15, %v14
    %s17 = scalar_lea.vmem %s0, 5
    %v18 = vld [vmem:[%s17] sm:$0x1]
    %19 = vrot.lane.b32.xlu0 %v18, 20
    %v20 = vpop.permute.xlu0 %19
    %vm21 = vcmask 195744
    %22 = vst.msk [vmem:[#allocation0] sm:$0x1] %vm21, %v20
    %s23 = scalar_lea.vmem %s0, 4
    %v24 = vld [vmem:[%s23] sm:$0x1]
    %25 = vrot.lane.b32.xlu0 %v24, 16
    %v26 = vpop.permute.xlu0 %25
    %vm27 = vcmask 162944
    %28 = vst.msk [vmem:[#allocation0] sm:$0x1] %vm27, %v26
    %s29 = scalar_lea.vmem %s0, 3
    %v30 = vld [vmem:[%s29] sm:$0x1]
    %31 = vrot.lane.b32.xlu0 %v30, 12
    %v32 = vpop.permute.xlu0 %31
    %vm33 = vcmask 130144
    %34 = vst.msk [vmem:[#allocation0] sm:$0x1] %vm33, %v32
    %s35 = scalar_lea.vmem %s0, 2
    %v36 = vld [vmem:[%s35] sm:$0x1]
    %37 = vrot.lane.b32.xlu0 %v36, 8
    %v38 = vpop.permute.xlu0 %37
    %vm39 = vcmask 97344
    %40 = vst.msk [vmem:[#allocation0] sm:$0x1] %vm39, %v38
    %s41 = scalar_lea.vmem %s0, 1
    %v42 = vld [vmem:[%s41] sm:$0x1]
    %43 = vrot.lane.b32.xlu0 %v42, 4
    %v44 = vpop.permute.xlu0 %43
    %vm45 = vcmask 64544
    %46 = vst.msk [vmem:[#allocation0] sm:$0x1] %vm45, %v44
    %s48 = sshllo.u32 0, 1
    %v50 = vld [vmem:[#allocation0] sm:%s48]
    %s51 = sshllo.u32 0, 1
    %52 = vst [vmem:[%s1] sm:%s51] %v50

// kernel: forward_all_policy.1
$region0: #{forward_all_policy.1}
  #allocation0 [shape = 'u32[]', space=smem, size = 0x4, offset = 0x4, fixed_abs, tag = 'smem constant byte address 0x4 - core index']
  #allocation1 [shape = 'u32[144,128]{1,0:T(1,128)}', space=vmem, size = 0x12000, scoped, tag = 'internal scratch']
  %s0 = inlined_call_operand.vmem [shape: f32[8,16], index: 0, kind: input, shape index: {}]
  %s1 = inlined_call_operand.vmem [shape: f32[16,32], index: 1, kind: input, shape index: {}]
  %s2 = inlined_call_operand.vmem [shape: f32[1,32], index: 2, kind: input, shape index: {}]
  %s3 = inlined_call_operand.vmem [shape: f32[32,32], index: 3, kind: input, shape index: {}]
  %s4 = inlined_call_operand.vmem [shape: f32[1,32], index: 4, kind: input, shape index: {}]
  %s5 = inlined_call_operand.vmem [shape: f32[32,128], index: 5, kind: input, shape index: {}]
  %s6 = inlined_call_operand.vmem [shape: f32[1,128], index: 6, kind: input, shape index: {}]
  %s7 = inlined_call_operand.vmem [shape: f32[1,128], index: 7, kind: input, shape index: {}]
  %s8 = inlined_call_operand.vmem [shape: f32[1,128], index: 8, kind: input, shape index: {}]
  %s9 = inlined_call_operand.vmem [shape: f32[8,128], index: 9, kind: output, shape index: {}]
  %s10 = sld [smem:[#allocation0]]
  $region46: #{forward_all_policy.1} parent=0
    _
  %s12 = ssub.s32 1, %s10
  %s13 = scalar_select 0, %s12, %s10
  // Predicated region
  $region2: #{forward_all_policy.1} parent=0 // pred_check
    _
  $region3: #{forward_all_policy.1} parent=0 // pred_check_branch
    %15 = sbr.rel (0) target = $region5
  $region4: #{forward_all_policy.1} parent=0 // pred_region
    _
  $region5: #{forward_all_policy.1} parent=0 // pred_fallthru
    _
  // Predicated region
  $region6: #{forward_all_policy.1} parent=0 // pred_check
    _
  $region7: #{forward_all_policy.1} parent=0 // pred_check_branch
    %17 = sbr.rel (0) target = $region9
  $region8: #{forward_all_policy.1} parent=0 // pred_region
    _
  $region9: #{forward_all_policy.1} parent=0 // pred_fallthru
    _
  // Predicated region
  $region10: #{forward_all_policy.1} parent=0 // pred_check
    _
  $region11: #{forward_all_policy.1} parent=0 // pred_check_branch
    %19 = sbr.rel (0) target = $region13
  $region12: #{forward_all_policy.1} parent=0 // pred_region
    _
  $region13: #{forward_all_policy.1} parent=0 // pred_fallthru
    _
  // Predicated region
  $region14: #{forward_all_policy.1} parent=0 // pred_check
    _
  $region15: #{forward_all_policy.1} parent=0 // pred_check_branch
    %21 = sbr.rel (0) target = $region17
  $region16: #{forward_all_policy.1} parent=0 // pred_region
    _
  $region17: #{forward_all_policy.1} parent=0 // pred_fallthru
    _
  // Predicated region
  $region18: #{forward_all_policy.1} parent=0 // pred_check
    _
  $region19: #{forward_all_policy.1} parent=0 // pred_check_branch
    %23 = sbr.rel (0) target = $region21
  $region20: #{forward_all_policy.1} parent=0 // pred_region
    _
  $region21: #{forward_all_policy.1} parent=0 // pred_fallthru
    _
  // Predicated region
  $region22: #{forward_all_policy.1} parent=0 // pred_check
    _
  $region23: #{forward_all_policy.1} parent=0 // pred_check_branch
    %25 = sbr.rel (0) target = $region25
  $region24: #{forward_all_policy.1} parent=0 // pred_region
    _
  $region25: #{forward_all_policy.1} parent=0 // pred_fallthru
    _
  // Predicated region
  $region26: #{forward_all_policy.1} parent=0 // pred_check
    _
  $region27: #{forward_all_policy.1} parent=0 // pred_check_branch
    %27 = sbr.rel (0) target = $region29
  $region28: #{forward_all_policy.1} parent=0 // pred_region
    _
  $region29: #{forward_all_policy.1} parent=0 // pred_fallthru
    _
  // Predicated region
  $region30: #{forward_all_policy.1} parent=0 // pred_check
    _
  $region31: #{forward_all_policy.1} parent=0 // pred_check_branch
    %29 = sbr.rel (0) target = $region33
  $region32: #{forward_all_policy.1} parent=0 // pred_region
    _
  $region33: #{forward_all_policy.1} parent=0 // pred_fallthru
    _
  // Predicated region
  $region34: #{forward_all_policy.1} parent=0 // pred_check
    _
  $region35: #{forward_all_policy.1} parent=0 // pred_check_branch
    %31 = sbr.rel (0) target = $region37
  $region36: #{forward_all_policy.1} parent=0 // pred_region
    _
  $region37: #{forward_all_policy.1} parent=0 // pred_fallthru
    _
  %v32 = vld [vmem:[%s0] sm:$0xff]
  %v33 = vld [vmem:[%s1] sm:$0xff]
  %v34 = vld [vmem:[%s1 + $0x8] sm:$0xff]
  %v35 = vld [vmem:[%s2] sm:$0x1]
  %v37 = vlaneseq
  %v38 = vshrl.u32 %v37, 7
  %v39 = vsub.s32 0, %v38
  %v40 = vrot.slane %v35, %v39
  %vm42 = vcmask 130048
  %v44 = vsel %vm42, %v32, 0
  %46 = vmatprep.subr.mxu0 0.0
  %47 = vmatpush1.msra.mxu0 %v33
  %48 = vmatprep.subr.mxu0 0.0
  %49 = vmatpush1.msra.mxu0 %v34
  %50 = vmatprep.subr.mxu0 0.0
  %51 = vmatpush1.msra.mxu0 0.0
  %52 = vmatprep.subr.mxu0 0.0
  %53 = vmatpush1.msra.mxu0 0.0
  %54 = vmatprep.subr.mxu0 0.0
  %55 = vmatpush1.msra.mxu0 0.0
  %56 = vmatprep.subr.mxu0 0.0
  %57 = vmatpush1.msra.mxu0 0.0
  %58 = vmatprep.subr.mxu0 0.0
  %59 = vmatpush1.msra.mxu0 0.0
  %60 = vmatprep.subr.mxu0 0.0
  %61 = vmatpush1.msra.mxu0 0.0
  %62 = vmatprep.subr.mxu0 0.0
  %63 = vmatpush1.msra.mxu0 0.0
  %64 = vmatprep.subr.mxu0 0.0
  %65 = vmatpush1.msra.mxu0 0.0
  %66 = vmatprep.subr.mxu0 0.0
  %67 = vmatpush1.msra.mxu0 0.0
  %68 = vmatprep.subr.mxu0 0.0
  %69 = vmatpush1.msra.mxu0 0.0
  %70 = vmatprep.subr.mxu0 0.0
  %71 = vmatpush1.msra.mxu0 0.0
  %72 = vmatprep.subr.mxu0 0.0
  %73 = vmatpush1.msra.mxu0 0.0
  %74 = vmatprep.subr.mxu0 0.0
  %75 = vmatpush1.msra.mxu0 0.0
  %76 = vmatprep.subr.mxu0 0.0
  %77 = vmatpush1.msra.mxu0 0.0
  %78 = vmatprep.subr.mxu0 0.0
  %79 = vmatpush1.msra.mxu0 0.0
  %80 = vmatprep.subr.mxu0 0.0
  %81 = vmatpush1.msra.mxu0 0.0
  %82 = vmatprep.subr.mxu0 0.0
  %83 = vmatpush1.msra.mxu0 0.0
  %84 = vmatprep.subr.mxu0 0.0
  %85 = vmatpush1.msra.mxu0 0.0
  %86 = vmatprep.subr.mxu0 0.0
  %87 = vmatpush1.msra.mxu0 0.0
  %88 = vmatprep.subr.mxu0 0.0
  %89 = vmatpush1.msra.mxu0 0.0
  %90 = vmatprep.subr.mxu0 0.0
  %91 = vmatpush1.msra.mxu0 0.0
  %92 = vmatprep.subr.mxu0 0.0
  %93 = vmatpush1.msra.mxu0 0.0
  %94 = vmatprep.subr.mxu0 0.0
  %95 = vmatpush1.msra.mxu0 0.0
  %96 = vmatprep.subr.mxu0 0.0
  %97 = vmatpush1.msra.mxu0 0.0
  %98 = vmatprep.subr.mxu0 0.0
  %99 = vmatpush1.msra.mxu0 0.0
  %100 = vmatprep.subr.mxu0 0.0
  %101 = vmatpush1.msra.mxu0 0.0
  %102 = vmatprep.subr.mxu0 0.0
  %103 = vmatpush1.msra.mxu0 0.0
  %104 = vmatprep.subr.mxu0 0.0
  %105 = vmatpush1.msra.mxu0 0.0
  %106 = vmatprep.subr.mxu0 0.0
  %107 = vmatpush1.msra.mxu0 0.0
  %108 = vmatprep.subr.mxu0 0.0
  %109 = vmatpush1.msra.mxu0 0.0
  %110 = vmatprep.mubr.f32.mxu0 0.0
  %111 = vmatmul.mubr.f32.gmra.mrb[0].mxu0 %v44
  %v112 = vpop.f32.mrb[0].mxu0
  %v113 = vadd.f32 %v40, %v112
  %v114 = vpop.f32.mrb[0].mxu0
  %115 = vdwg.mxu0
  %v116 = vmax.f32 %v113, 0.0
  %v117 = vld [vmem:[%s3] sm:$0xff]
  %v118 = vld [vmem:[%s3 + $0x8] sm:$0xff]
  %v119 = vld [vmem:[%s3 + $0x10] sm:$0xff]
  %v120 = vld [vmem:[%s3 + $0x18] sm:$0xff]
  %v121 = vld [vmem:[%s4] sm:$0x1]
  %v123 = vlaneseq
  %v124 = vshrl.u32 %v123, 7
  %v125 = vsub.s32 0, %v124
  %v126 = vrot.slane %v121, %v125
  %vm128 = vcmask 261120
  %v130 = vsel %vm128, %v116, 0
  %132 = vmatprep.subr.mxu0 0.0
  %133 = vmatpush1.msra.mxu0 %v117
  %134 = vmatprep.subr.mxu0 0.0
  %135 = vmatpush1.msra.mxu0 %v118
  %136 = vmatprep.subr.mxu0 0.0
  %137 = vmatpush1.msra.mxu0 %v119
  %138 = vmatprep.subr.mxu0 0.0
  %139 = vmatpush1.msra.mxu0 %v120
  %140 = vmatprep.subr.mxu0 0.0
  %141 = vmatpush1.msra.mxu0 0.0
  %142 = vmatprep.subr.mxu0 0.0
  %143 = vmatpush1.msra.mxu0 0.0
  %144 = vmatprep.subr.mxu0 0.0
  %145 = vmatpush1.msra.mxu0 0.0
  %146 = vmatprep.subr.mxu0 0.0
  %147 = vmatpush1.msra.mxu0 0.0
  %148 = vmatprep.subr.mxu0 0.0
  %149 = vmatpush1.msra.mxu0 0.0
  %150 = vmatprep.subr.mxu0 0.0
  %151 = vmatpush1.msra.mxu0 0.0
  %152 = vmatprep.subr.mxu0 0.0
  %153 = vmatpush1.msra.mxu0 0.0
  %154 = vmatprep.subr.mxu0 0.0
  %155 = vmatpush1.msra.mxu0 0.0
  %156 = vmatprep.subr.mxu0 0.0
  %157 = vmatpush1.msra.mxu0 0.0
  %158 = vmatprep.subr.mxu0 0.0
  %159 = vmatpush1.msra.mxu0 0.0
  %160 = vmatprep.subr.mxu0 0.0
  %161 = vmatpush1.msra.mxu0 0.0
  %162 = vmatprep.subr.mxu0 0.0
  %163 = vmatpush1.msra.mxu0 0.0
  %164 = vmatprep.subr.mxu0 0.0
  %165 = vmatpush1.msra.mxu0 0.0
  %166 = vmatprep.subr.mxu0 0.0
  %167 = vmatpush1.msra.mxu0 0.0
  %168 = vmatprep.subr.mxu0 0.0
  %169 = vmatpush1.msra.mxu0 0.0
  %170 = vmatprep.subr.mxu0 0.0
  %171 = vmatpush1.msra.mxu0 0.0
  %172 = vmatprep.subr.mxu0 0.0
  %173 = vmatpush1.msra.mxu0 0.0
  %174 = vmatprep.subr.mxu0 0.0
  %175 = vmatpush1.msra.mxu0 0.0
  %176 = vmatprep.subr.mxu0 0.0
  %177 = vmatpush1.msra.mxu0 0.0
  %178 = vmatprep.subr.mxu0 0.0
  %179 = vmatpush1.msra.mxu0 0.0
  %180 = vmatprep.subr.mxu0 0.0
  %181 = vmatpush1.msra.mxu0 0.0
  %182 = vmatprep.subr.mxu0 0.0
  %183 = vmatpush1.msra.mxu0 0.0
  %184 = vmatprep.subr.mxu0 0.0
  %185 = vmatpush1.msra.mxu0 0.0
  %186 = vmatprep.subr.mxu0 0.0
  %187 = vmatpush1.msra.mxu0 0.0
  %188 = vmatprep.subr.mxu0 0.0
  %189 = vmatpush1.msra.mxu0 0.0
  %190 = vmatprep.subr.mxu0 0.0
  %191 = vmatpush1.msra.mxu0 0.0
  %192 = vmatprep.subr.mxu0 0.0
  %193 = vmatpush1.msra.mxu0 0.0
  %194 = vmatprep.subr.mxu0 0.0
  %195 = vmatpush1.msra.mxu0 0.0
  %196 = vmatprep.mubr.f32.mxu0 0.0
  %197 = vmatmul.mubr.f32.gmra.mrb[0].mxu0 %v130
  %v198 = vpop.f32.mrb[0].mxu0
  %v199 = vadd.f32 %v126, %v198
  %v200 = vpop.f32.mrb[0].mxu0
  %201 = vdwg.mxu0
  %v202 = vmax.f32 %v199, 0.0
  %v203 = vld [vmem:[%s5] sm:$0xff]
  %v204 = vld [vmem:[%s5 + $0x8] sm:$0xff]
  %v205 = vld [vmem:[%s5 + $0x10] sm:$0xff]
  %v206 = vld [vmem:[%s5 + $0x18] sm:$0xff]
  %v207 = vld [vmem:[%s6] sm:$0x1]
  %v209 = vlaneseq
  %v210 = vshrl.u32 %v209, 7
  %v211 = vsub.s32 0, %v210
  %v212 = vrot.slane %v207, %v211
  %v215 = vsel %vm128, %v202, 0
  %217 = vmatprep.subr.mxu0 0.0
  %218 = vmatpush1.msra.mxu0 %v203
  %219 = vmatprep.subr.mxu0 0.0
  %220 = vmatpush1.msra.mxu0 %v204
  %221 = vmatprep.subr.mxu0 0.0
  %222 = vmatpush1.msra.mxu0 %v205
  %223 = vmatprep.subr.mxu0 0.0
  %224 = vmatpush1.msra.mxu0 %v206
  %225 = vmatprep.subr.mxu0 0.0
  %226 = vmatpush1.msra.mxu0 0.0
  %227 = vmatprep.subr.mxu0 0.0
  %228 = vmatpush1.msra.mxu0 0.0
  %229 = vmatprep.subr.mxu0 0.0
  %230 = vmatpush1.msra.mxu0 0.0
  %231 = vmatprep.subr.mxu0 0.0
  %232 = vmatpush1.msra.mxu0 0.0
  %233 = vmatprep.subr.mxu0 0.0
  %234 = vmatpush1.msra.mxu0 0.0
  %235 = vmatprep.subr.mxu0 0.0
  %236 = vmatpush1.msra.mxu0 0.0
  %237 = vmatprep.subr.mxu0 0.0
  %238 = vmatpush1.msra.mxu0 0.0
  %239 = vmatprep.subr.mxu0 0.0
  %240 = vmatpush1.msra.mxu0 0.0
  %241 = vmatprep.subr.mxu0 0.0
  %242 = vmatpush1.msra.mxu0 0.0
  %243 = vmatprep.subr.mxu0 0.0
  %244 = vmatpush1.msra.mxu0 0.0
  %245 = vmatprep.subr.mxu0 0.0
  %246 = vmatpush1.msra.mxu0 0.0
  %247 = vmatprep.subr.mxu0 0.0
  %248 = vmatpush1.msra.mxu0 0.0
  %249 = vmatprep.subr.mxu0 0.0
  %250 = vmatpush1.msra.mxu0 0.0
  %251 = vmatprep.subr.mxu0 0.0
  %252 = vmatpush1.msra.mxu0 0.0
  %253 = vmatprep.subr.mxu0 0.0
  %254 = vmatpush1.msra.mxu0 0.0
  %255 = vmatprep.subr.mxu0 0.0
  %256 = vmatpush1.msra.mxu0 0.0
  %257 = vmatprep.subr.mxu0 0.0
  %258 = vmatpush1.msra.mxu0 0.0
  %259 = vmatprep.subr.mxu0 0.0
  %260 = vmatpush1.msra.mxu0 0.0
  %261 = vmatprep.subr.mxu0 0.0
  %262 = vmatpush1.msra.mxu0 0.0
  %263 = vmatprep.subr.mxu0 0.0
  %264 = vmatpush1.msra.mxu0 0.0
  %265 = vmatprep.subr.mxu0 0.0
  %266 = vmatpush1.msra.mxu0 0.0
  %267 = vmatprep.subr.mxu0 0.0
  %268 = vmatpush1.msra.mxu0 0.0
  %269 = vmatprep.subr.mxu0 0.0
  %270 = vmatpush1.msra.mxu0 0.0
  %271 = vmatprep.subr.mxu0 0.0
  %272 = vmatpush1.msra.mxu0 0.0
  %273 = vmatprep.subr.mxu0 0.0
  %274 = vmatpush1.msra.mxu0 0.0
  %275 = vmatprep.subr.mxu0 0.0
  %276 = vmatpush1.msra.mxu0 0.0
  %277 = vmatprep.subr.mxu0 0.0
  %278 = vmatpush1.msra.mxu0 0.0
  %279 = vmatprep.subr.mxu0 0.0
  %280 = vmatpush1.msra.mxu0 0.0
  %281 = vmatprep.mubr.f32.mxu0 0.0
  %282 = vmatmul.mubr.f32.gmra.mrb[0].mxu0 %v215
  %v283 = vpop.f32.mrb[0].mxu0
  %v284 = vadd.f32 %v212, %v283
  %v285 = vpop.f32.mrb[0].mxu0
  %286 = vdwg.mxu0
  %v287 = vld [vmem:[%s7] sm:$0x1]
  %v288 = vtanh.pop %v284
  %v290 = vlaneseq
  %v291 = vshrl.u32 %v290, 7
  %v292 = vsub.s32 0, %v291
  %v293 = vrot.slane %v287, %v292
  %v295 = vmul.f32 %v293, %v288
  %v296 = vld [vmem:[%s8] sm:$0x1]
  %v298 = vlaneseq
  %v299 = vshrl.u32 %v298, 7
  %v300 = vsub.s32 0, %v299
  %v301 = vrot.slane %v296, %v300
  %v303 = vadd.f32 %v295, %v301
  %304 = vst [vmem:[%s9] sm:$0xff] %v303
  // Predicated region
  $region38: #{forward_all_policy.1} parent=0 // pred_check
    _
  $region39: #{forward_all_policy.1} parent=0 // pred_check_branch
    %306 = sbr.rel (0) target = $region41
  $region40: #{forward_all_policy.1} parent=0 // pred_region
    _
  $region41: #{forward_all_policy.1} parent=0 // pred_fallthru
    _
  // Predicated region
  $region42: #{forward_all_policy.1} parent=0 // pred_check
    _
  $region43: #{forward_all_policy.1} parent=0 // pred_check_branch
    %308 = sbr.rel (0) target = $region45
  $region44: #{forward_all_policy.1} parent=0 // pred_region
    _
  $region45: #{forward_all_policy.1} parent=0 // pred_fallthru
    _

</llo_original>
